<compile_context>
chip_gen: v7x
topology: tpu7x:2x2x1
jax: 0.10.0
libtpu: 0.0.40
codegen_flags: <defaults>
</compile_context>

<pallas_src>
import numpy as np
import jax
import jax.numpy as jnp
from jax.experimental import pallas as pl
from jax.experimental.pallas import tpu as pltpu

# ----------------------------- model config ---------------------------------
B = 2            # batch
C = 4            # input channels
H = W = 16       # spatial
PATCH = 4        # patch size
P = (H // PATCH) * (W // PATCH)       # 16 patches per image
D_PATCH = C * PATCH * PATCH           # 64 features per patch
HIDDEN = 32
NUM_CLASSES = 8
M_PAD = 8                             # sublane-dense padded output rows
N_PAD = 128                           # lane-dense padded output lanes


# ------------------------------ Pallas kernel --------------------------------
def _classifier_kernel(patches_ref, pool_ref, w_e_ref, b_e_ref,
                       w_h_ref, b_h_ref, out_ref):
    # patches_ref: [B*P, D_PATCH]   pool_ref: [M_PAD, B*P] (constant seg-mean)
    # patch embedding (one MXU matmul for the whole batch) + bias + ReLU
    hid = jnp.dot(patches_ref[...], w_e_ref[...],
                  preferred_element_type=jnp.float32)          # [B*P, HIDDEN]
    hid = jnp.maximum(hid + b_e_ref[...], 0.0)                 # f32 elementwise

    # mean-pool over patches via the precomputed segment-mean matrix
    pooled = jnp.dot(pool_ref[...], hid,
                     preferred_element_type=jnp.float32)       # [M_PAD, HIDDEN]

    # classifier head: [M_PAD, HIDDEN] x [HIDDEN, N_PAD], fully dense tile
    logits = jnp.dot(pooled, w_h_ref[...],
                     preferred_element_type=jnp.float32)       # [M_PAD, N_PAD]
    logits = logits + b_h_ref[...]

    out_ref[...] = logits.astype(out_ref.dtype)                # one unmasked (8,128) store


def _forward(x_nchw, pool, w_embed, b_embed, w_head_p, b_head_p):
    """Equivalent of HuggingfaceToTensorModelWrapper(model)(x) -> logits."""
    b, c, h, w = x_nchw.shape
    assert (b, c, h, w) == (B, C, H, W)

    # ---- NCHW -> flat patches [B*P, D_PATCH] (fused into input DMA when possible)
    xp = x_nchw.reshape(b, c, h // PATCH, PATCH, w // PATCH, PATCH)
    xp = jnp.transpose(xp, (0, 2, 4, 1, 3, 5))                 # [B, Hp, Wp, C, p, p]
    patches = xp.reshape(b * P, D_PATCH).astype(jnp.float32)   # [B*P, D_PATCH]

    logits_padded = pl.pallas_call(
        _classifier_kernel,
        out_shape=jax.ShapeDtypeStruct((M_PAD, N_PAD), jnp.float32),
        compiler_params=pltpu.CompilerParams(
            allow_input_fusion=[True, False, False, False, False, False]),
    )(patches, pool, w_embed, b_embed, w_head_p, b_head_p)

    return logits_padded[:B, :NUM_CLASSES]                      # [B, NUM_CLASSES]


hf_wrapper_forward = jax.jit(_forward)


# --------------------------- deterministic params ----------------------------
def make_params(key):
    k1, k2, k3, k4 = jax.random.split(key, 4)
    w_embed = jax.random.normal(k1, (D_PATCH, HIDDEN), jnp.float32) * (1.0 / jnp.sqrt(D_PATCH))
    b_embed = jax.random.normal(k2, (1, HIDDEN), jnp.float32) * 0.01
    w_head = jax.random.normal(k3, (HIDDEN, NUM_CLASSES), jnp.float32) * (1.0 / jnp.sqrt(HIDDEN))
    b_head = jax.random.normal(k4, (1, NUM_CLASSES), jnp.float32) * 0.01
    return w_embed, b_embed, w_head, b_head


def prepare_kernel_params(w_embed, b_embed, w_head, b_head):
    """One-time packing: pad head to 128 lanes, build the segment-mean matrix."""
    w_head_p = jnp.zeros((HIDDEN, N_PAD), jnp.float32).at[:, :NUM_CLASSES].set(w_head)
    b_head_p = jnp.zeros((1, N_PAD), jnp.float32).at[:, :NUM_CLASSES].set(b_head)
    pool_np = np.zeros((M_PAD, B * P), np.float32)
    for i in range(B):
        pool_np[i, i * P:(i + 1) * P] = 1.0 / P                # rows >= B stay zero
    pool = jnp.asarray(pool_np)
    return pool, w_embed, b_embed, w_head_p, b_head_p


# ------------------------------- reference -----------------------------------
def _reference(x_nchw, w_embed, b_embed, w_head, b_head):
    b = x_nchw.shape[0]
    xp = x_nchw.reshape(b, C, H // PATCH, PATCH, W // PATCH, PATCH)
    xp = jnp.transpose(xp, (0, 2, 4, 1, 3, 5)).reshape(b, P, D_PATCH)
    hid = jnp.maximum(xp @ w_embed + b_embed, 0.0)
    pooled = jnp.mean(hid, axis=1)
    return pooled @ w_head + b_head


if __name__ == "__main__":
    key = jax.random.PRNGKey(0)
    kx, kp = jax.random.split(key)
    x = jax.random.normal(kx, (B, C, H, W), jnp.float32)       # NCHW, like PyTorch
    params = make_params(kp)
    kernel_params = prepare_kernel_params(*params)             # one-time init path

    logits = hf_wrapper_forward(x, *kernel_params)
    logits = jax.block_until_ready(logits)

    ref = _reference(x, *params)
    assert logits.shape == (B, NUM_CLASSES)
    assert jnp.allclose(logits, ref, atol=1e-4, rtol=1e-4), "mismatch vs reference"

    print("KERNEL_OK")
</pallas_src>

<mosaic_0001>
module attributes {stable_mosaic.version = 11 : i64} {
  func.func @_classifier_kernel(%arg0: memref<32x64xf32, #tpu.memory_space<vmem>>, %arg1: memref<8x32xf32, #tpu.memory_space<vmem>>, %arg2: memref<64x32xf32, #tpu.memory_space<vmem>>, %arg3: memref<1x32xf32, #tpu.memory_space<vmem>>, %arg4: memref<32x128xf32, #tpu.memory_space<vmem>>, %arg5: memref<1x128xf32, #tpu.memory_space<vmem>>, %arg6: memref<8x128xf32, #tpu.memory_space<vmem>>) attributes {dimension_semantics = [], scalar_prefetch = 0 : i64, scratch_operands = 0 : i64, tpu.core_type = #tpu.core_type<tc>} {
    %c0 = arith.constant 0 : index
    %c0_0 = arith.constant 0 : index
    %0 = vector.load %arg0[%c0, %c0_0] : memref<32x64xf32, #tpu.memory_space<vmem>>, vector<32x64xf32>
    %c0_1 = arith.constant 0 : index
    %c0_2 = arith.constant 0 : index
    %1 = vector.load %arg2[%c0_1, %c0_2] : memref<64x32xf32, #tpu.memory_space<vmem>>, vector<64x32xf32>
    %cst = arith.constant dense<0.000000e+00> : vector<32x32xf32>
    %2 = tpu.matmul %0, %1, %cst {dimension_numbers = #tpu.dot_dimension_numbers<[1], [0], [0], [1], [0, 0, 1, 1], [], []>} : vector<32x64xf32>, vector<64x32xf32>, vector<32x32xf32> -> vector<32x32xf32>
    %c0_3 = arith.constant 0 : index
    %c0_4 = arith.constant 0 : index
    %3 = vector.load %arg3[%c0_3, %c0_4] : memref<1x32xf32, #tpu.memory_space<vmem>>, vector<1x32xf32>
    %4 = vector.broadcast %3 : vector<1x32xf32> to vector<32x32xf32>
    %5 = arith.addf %2, %4 : vector<32x32xf32>
    %cst_5 = arith.constant 0.000000e+00 : f32
    %6 = vector.broadcast %cst_5 : f32 to vector<32x32xf32>
    %7 = arith.maximumf %5, %6 : vector<32x32xf32>
    %c0_6 = arith.constant 0 : index
    %c0_7 = arith.constant 0 : index
    %8 = vector.load %arg1[%c0_6, %c0_7] : memref<8x32xf32, #tpu.memory_space<vmem>>, vector<8x32xf32>
    %cst_8 = arith.constant dense<0.000000e+00> : vector<8x32xf32>
    %9 = tpu.matmul %8, %7, %cst_8 {dimension_numbers = #tpu.dot_dimension_numbers<[1], [0], [0], [1], [0, 0, 1, 1], [], []>} : vector<8x32xf32>, vector<32x32xf32>, vector<8x32xf32> -> vector<8x32xf32>
    %c0_9 = arith.constant 0 : index
    %c0_10 = arith.constant 0 : index
    %10 = vector.load %arg4[%c0_9, %c0_10] : memref<32x128xf32, #tpu.memory_space<vmem>>, vector<32x128xf32>
    %cst_11 = arith.constant dense<0.000000e+00> : vector<8x128xf32>
    %11 = tpu.matmul %9, %10, %cst_11 {dimension_numbers = #tpu.dot_dimension_numbers<[1], [0], [0], [1], [0, 0, 1, 1], [], []>} : vector<8x32xf32>, vector<32x128xf32>, vector<8x128xf32> -> vector<8x128xf32>
    %c0_12 = arith.constant 0 : index
    %c0_13 = arith.constant 0 : index
    %12 = vector.load %arg5[%c0_12, %c0_13] : memref<1x128xf32, #tpu.memory_space<vmem>>, vector<1x128xf32>
    %13 = vector.broadcast %12 : vector<1x128xf32> to vector<8x128xf32>
    %14 = arith.addf %11, %13 : vector<8x128xf32>
    %c0_14 = arith.constant 0 : index
    %c0_15 = arith.constant 0 : index
    %15 = vector.load %arg6[%c0_14, %c0_15] : memref<8x128xf32, #tpu.memory_space<vmem>>, vector<8x128xf32>
    tpu.vector_store %arg6[%c0_14, %c0_15], %14 {strides = array<i32>} : memref<8x128xf32, #tpu.memory_space<vmem>>, vector<8x128xf32>,
    return
  }
}

</mosaic_0001>

<llo_original>
// kernel: _forward.1
$region0: #{_forward.1}
  #allocation0 [shape = 'u32[]', space=smem, size = 0x4, offset = 0x4, fixed_abs, tag = 'smem constant byte address 0x4 - core index']
  #allocation1 [shape = 'u32[144,128]{1,0:T(1,128)}', space=vmem, size = 0x12000, scoped, tag = 'internal scratch']
  %s0 = inlined_call_operand.vmem [shape: f32[32,64], index: 0, kind: input, shape index: {}]
  %s1 = inlined_call_operand.vmem [shape: f32[8,32], index: 1, kind: input, shape index: {}]
  %s2 = inlined_call_operand.vmem [shape: f32[64,32], index: 2, kind: input, shape index: {}]
  %s3 = inlined_call_operand.vmem [shape: f32[1,32], index: 3, kind: input, shape index: {}]
  %s4 = inlined_call_operand.vmem [shape: f32[32,128], index: 4, kind: input, shape index: {}]
  %s5 = inlined_call_operand.vmem [shape: f32[1,128], index: 5, kind: input, shape index: {}]
  %s6 = inlined_call_operand.vmem [shape: f32[8,128], index: 6, kind: output, shape index: {}]
  %s7 = sld [smem:[#allocation0]]
  $region34: #{_forward.1} parent=0
    _
  %s9 = ssub.s32 1, %s7
  %s10 = scalar_select 0, %s9, %s7
  // Predicated region
  $region2: #{_forward.1} parent=0 // pred_check
    _
  $region3: #{_forward.1} parent=0 // pred_check_branch
    %12 = sbr.rel (0) target = $region5
  $region4: #{_forward.1} parent=0 // pred_region
    _
  $region5: #{_forward.1} parent=0 // pred_fallthru
    _
  // Predicated region
  $region6: #{_forward.1} parent=0 // pred_check
    _
  $region7: #{_forward.1} parent=0 // pred_check_branch
    %14 = sbr.rel (0) target = $region9
  $region8: #{_forward.1} parent=0 // pred_region
    _
  $region9: #{_forward.1} parent=0 // pred_fallthru
    _
  // Predicated region
  $region10: #{_forward.1} parent=0 // pred_check
    _
  $region11: #{_forward.1} parent=0 // pred_check_branch
    %16 = sbr.rel (0) target = $region13
  $region12: #{_forward.1} parent=0 // pred_region
    _
  $region13: #{_forward.1} parent=0 // pred_fallthru
    _
  // Predicated region
  $region14: #{_forward.1} parent=0 // pred_check
    _
  $region15: #{_forward.1} parent=0 // pred_check_branch
    %18 = sbr.rel (0) target = $region17
  $region16: #{_forward.1} parent=0 // pred_region
    _
  $region17: #{_forward.1} parent=0 // pred_fallthru
    _
  // Predicated region
  $region18: #{_forward.1} parent=0 // pred_check
    _
  $region19: #{_forward.1} parent=0 // pred_check_branch
    %20 = sbr.rel (0) target = $region21
  $region20: #{_forward.1} parent=0 // pred_region
    _
  $region21: #{_forward.1} parent=0 // pred_fallthru
    _
  // Predicated region
  $region22: #{_forward.1} parent=0 // pred_check
    _
  $region23: #{_forward.1} parent=0 // pred_check_branch
    %22 = sbr.rel (0) target = $region25
  $region24: #{_forward.1} parent=0 // pred_region
    _
  $region25: #{_forward.1} parent=0 // pred_fallthru
    _
  %v23 = vld [vmem:[%s0] sm:$0xff]
  %v24 = vld [vmem:[%s0 + $0x8] sm:$0xff]
  %v25 = vld [vmem:[%s0 + $0x10] sm:$0xff]
  %v26 = vld [vmem:[%s0 + $0x18] sm:$0xff]
  %v27 = vld [vmem:[%s2] sm:$0xff]
  %v28 = vld [vmem:[%s2 + $0x8] sm:$0xff]
  %v29 = vld [vmem:[%s2 + $0x10] sm:$0xff]
  %v30 = vld [vmem:[%s2 + $0x18] sm:$0xff]
  %v31 = vld [vmem:[%s2 + $0x20] sm:$0xff]
  %v32 = vld [vmem:[%s2 + $0x28] sm:$0xff]
  %v33 = vld [vmem:[%s2 + $0x30] sm:$0xff]
  %v34 = vld [vmem:[%s2 + $0x38] sm:$0xff]
  %v35 = vld [vmem:[%s3] sm:$0x1]
  %v37 = vlaneseq
  %v38 = vshrl.u32 %v37, 7
  %v39 = vsub.s32 0, %v38
  %v40 = vrot.slane %v35, %v39
  %vm42 = vcmask 523264
  %v44 = vsel %vm42, %v23, 0
  %v47 = vsel %vm42, %v24, 0
  %v50 = vsel %vm42, %v25, 0
  %v53 = vsel %vm42, %v26, 0
  %55 = vmatprep.subr.mxu0 0.0
  %56 = vmatpush1.msra.mxu0 %v27
  %57 = vmatprep.subr.mxu0 0.0
  %58 = vmatpush1.msra.mxu0 %v28
  %59 = vmatprep.subr.mxu0 0.0
  %60 = vmatpush1.msra.mxu0 %v29
  %61 = vmatprep.subr.mxu0 0.0
  %62 = vmatpush1.msra.mxu0 %v30
  %63 = vmatprep.subr.mxu0 0.0
  %64 = vmatpush1.msra.mxu0 %v31
  %65 = vmatprep.subr.mxu0 0.0
  %66 = vmatpush1.msra.mxu0 %v32
  %67 = vmatprep.subr.mxu0 0.0
  %68 = vmatpush1.msra.mxu0 %v33
  %69 = vmatprep.subr.mxu0 0.0
  %70 = vmatpush1.msra.mxu0 %v34
  %71 = vmatprep.subr.mxu0 0.0
  %72 = vmatpush1.msra.mxu0 0.0
  %73 = vmatprep.subr.mxu0 0.0
  %74 = vmatpush1.msra.mxu0 0.0
  %75 = vmatprep.subr.mxu0 0.0
  %76 = vmatpush1.msra.mxu0 0.0
  %77 = vmatprep.subr.mxu0 0.0
  %78 = vmatpush1.msra.mxu0 0.0
  %79 = vmatprep.subr.mxu0 0.0
  %80 = vmatpush1.msra.mxu0 0.0
  %81 = vmatprep.subr.mxu0 0.0
  %82 = vmatpush1.msra.mxu0 0.0
  %83 = vmatprep.subr.mxu0 0.0
  %84 = vmatpush1.msra.mxu0 0.0
  %85 = vmatprep.subr.mxu0 0.0
  %86 = vmatpush1.msra.mxu0 0.0
  %87 = vmatprep.subr.mxu0 0.0
  %88 = vmatpush1.msra.mxu0 0.0
  %89 = vmatprep.subr.mxu0 0.0
  %90 = vmatpush1.msra.mxu0 0.0
  %91 = vmatprep.subr.mxu0 0.0
  %92 = vmatpush1.msra.mxu0 0.0
  %93 = vmatprep.subr.mxu0 0.0
  %94 = vmatpush1.msra.mxu0 0.0
  %95 = vmatprep.subr.mxu0 0.0
  %96 = vmatpush1.msra.mxu0 0.0
  %97 = vmatprep.subr.mxu0 0.0
  %98 = vmatpush1.msra.mxu0 0.0
  %99 = vmatprep.subr.mxu0 0.0
  %100 = vmatpush1.msra.mxu0 0.0
  %101 = vmatprep.subr.mxu0 0.0
  %102 = vmatpush1.msra.mxu0 0.0
  %103 = vmatprep.subr.mxu0 0.0
  %104 = vmatpush1.msra.mxu0 0.0
  %105 = vmatprep.subr.mxu0 0.0
  %106 = vmatpush1.msra.mxu0 0.0
  %107 = vmatprep.subr.mxu0 0.0
  %108 = vmatpush1.msra.mxu0 0.0
  %109 = vmatprep.subr.mxu0 0.0
  %110 = vmatpush1.msra.mxu0 0.0
  %111 = vmatprep.subr.mxu0 0.0
  %112 = vmatpush1.msra.mxu0 0.0
  %113 = vmatprep.subr.mxu0 0.0
  %114 = vmatpush1.msra.mxu0 0.0
  %115 = vmatprep.subr.mxu0 0.0
  %116 = vmatpush1.msra.mxu0 0.0
  %117 = vmatprep.subr.mxu0 0.0
  %118 = vmatpush1.msra.mxu0 0.0
  %119 = vmatprep.mubr.f32.mxu0 0.0
  %120 = vmatmul.mubr.f32.gmra.mrb[0].mxu0 %v44
  %v121 = vpop.f32.mrb[0].mxu0
  %v122 = vadd.f32 %v40, %v121
  %v123 = vpop.f32.mrb[0].mxu0
  %124 = vmatprep.mubr.f32.mxu0 0.0
  %125 = vmatmul.mubr.f32.gmra.mrb[0].mxu0 %v47
  %v126 = vpop.f32.mrb[0].mxu0
  %v127 = vadd.f32 %v40, %v126
  %v128 = vpop.f32.mrb[0].mxu0
  %129 = vmatprep.mubr.f32.mxu0 0.0
  %130 = vmatmul.mubr.f32.gmra.mrb[0].mxu0 %v50
  %v131 = vpop.f32.mrb[0].mxu0
  %v132 = vadd.f32 %v40, %v131
  %v133 = vpop.f32.mrb[0].mxu0
  %134 = vmatprep.mubr.f32.mxu0 0.0
  %135 = vmatmul.mubr.f32.gmra.mrb[0].mxu0 %v53
  %v136 = vpop.f32.mrb[0].mxu0
  %v137 = vadd.f32 %v40, %v136
  %v138 = vpop.f32.mrb[0].mxu0
  %139 = vdwg.mxu0
  %v140 = vmax.f32 %v122, 0.0
  %v141 = vmax.f32 %v127, 0.0
  %v142 = vmax.f32 %v132, 0.0
  %v143 = vmax.f32 %v137, 0.0
  %v144 = vld [vmem:[%s1] sm:$0xff]
  %vm145 = vcmask 261120
  %v147 = vsel %vm145, %v144, 0
  %149 = vmatprep.subr.mxu0 0.0
  %150 = vmatpush1.msra.mxu0 %v140
  %151 = vmatprep.subr.mxu0 0.0
  %152 = vmatpush1.msra.mxu0 %v141
  %153 = vmatprep.subr.mxu0 0.0
  %154 = vmatpush1.msra.mxu0 %v142
  %155 = vmatprep.subr.mxu0 0.0
  %156 = vmatpush1.msra.mxu0 %v143
  %157 = vmatprep.subr.mxu0 0.0
  %158 = vmatpush1.msra.mxu0 0.0
  %159 = vmatprep.subr.mxu0 0.0
  %160 = vmatpush1.msra.mxu0 0.0
  %161 = vmatprep.subr.mxu0 0.0
  %162 = vmatpush1.msra.mxu0 0.0
  %163 = vmatprep.subr.mxu0 0.0
  %164 = vmatpush1.msra.mxu0 0.0
  %165 = vmatprep.subr.mxu0 0.0
  %166 = vmatpush1.msra.mxu0 0.0
  %167 = vmatprep.subr.mxu0 0.0
  %168 = vmatpush1.msra.mxu0 0.0
  %169 = vmatprep.subr.mxu0 0.0
  %170 = vmatpush1.msra.mxu0 0.0
  %171 = vmatprep.subr.mxu0 0.0
  %172 = vmatpush1.msra.mxu0 0.0
  %173 = vmatprep.subr.mxu0 0.0
  %174 = vmatpush1.msra.mxu0 0.0
  %175 = vmatprep.subr.mxu0 0.0
  %176 = vmatpush1.msra.mxu0 0.0
  %177 = vmatprep.subr.mxu0 0.0
  %178 = vmatpush1.msra.mxu0 0.0
  %179 = vmatprep.subr.mxu0 0.0
  %180 = vmatpush1.msra.mxu0 0.0
  %181 = vmatprep.subr.mxu0 0.0
  %182 = vmatpush1.msra.mxu0 0.0
  %183 = vmatprep.subr.mxu0 0.0
  %184 = vmatpush1.msra.mxu0 0.0
  %185 = vmatprep.subr.mxu0 0.0
  %186 = vmatpush1.msra.mxu0 0.0
  %187 = vmatprep.subr.mxu0 0.0
  %188 = vmatpush1.msra.mxu0 0.0
  %189 = vmatprep.subr.mxu0 0.0
  %190 = vmatpush1.msra.mxu0 0.0
  %191 = vmatprep.subr.mxu0 0.0
  %192 = vmatpush1.msra.mxu0 0.0
  %193 = vmatprep.subr.mxu0 0.0
  %194 = vmatpush1.msra.mxu0 0.0
  %195 = vmatprep.subr.mxu0 0.0
  %196 = vmatpush1.msra.mxu0 0.0
  %197 = vmatprep.subr.mxu0 0.0
  %198 = vmatpush1.msra.mxu0 0.0
  %199 = vmatprep.subr.mxu0 0.0
  %200 = vmatpush1.msra.mxu0 0.0
  %201 = vmatprep.subr.mxu0 0.0
  %202 = vmatpush1.msra.mxu0 0.0
  %203 = vmatprep.subr.mxu0 0.0
  %204 = vmatpush1.msra.mxu0 0.0
  %205 = vmatprep.subr.mxu0 0.0
  %206 = vmatpush1.msra.mxu0 0.0
  %207 = vmatprep.subr.mxu0 0.0
  %208 = vmatpush1.msra.mxu0 0.0
  %209 = vmatprep.subr.mxu0 0.0
  %210 = vmatpush1.msra.mxu0 0.0
  %211 = vmatprep.subr.mxu0 0.0
  %212 = vmatpush1.msra.mxu0 0.0
  %213 = vmatprep.mubr.f32.mxu0 0.0
  %214 = vmatmul.mubr.f32.gmra.mrb[0].mxu0 %v147
  %v215 = vpop.f32.mrb[0].mxu0
  %v216 = vadd.f32 0.0, %v215
  %v217 = vpop.f32.mrb[0].mxu0
  %218 = vdwg.mxu0
  %v219 = vld [vmem:[%s4] sm:$0xff]
  %v220 = vld [vmem:[%s4 + $0x8] sm:$0xff]
  %v221 = vld [vmem:[%s4 + $0x10] sm:$0xff]
  %v222 = vld [vmem:[%s4 + $0x18] sm:$0xff]
  %v223 = vld [vmem:[%s5] sm:$0x1]
  %v225 = vlaneseq
  %v226 = vshrl.u32 %v225, 7
  %v227 = vsub.s32 0, %v226
  %v228 = vrot.slane %v223, %v227
  %v231 = vsel %vm145, %v216, 0
  %233 = vmatprep.subr.mxu0 0.0
  %234 = vmatpush1.msra.mxu0 %v219
  %235 = vmatprep.subr.mxu0 0.0
  %236 = vmatpush1.msra.mxu0 %v220
  %237 = vmatprep.subr.mxu0 0.0
  %238 = vmatpush1.msra.mxu0 %v221
  %239 = vmatprep.subr.mxu0 0.0
  %240 = vmatpush1.msra.mxu0 %v222
  %241 = vmatprep.subr.mxu0 0.0
  %242 = vmatpush1.msra.mxu0 0.0
  %243 = vmatprep.subr.mxu0 0.0
  %244 = vmatpush1.msra.mxu0 0.0
  %245 = vmatprep.subr.mxu0 0.0
  %246 = vmatpush1.msra.mxu0 0.0
  %247 = vmatprep.subr.mxu0 0.0
  %248 = vmatpush1.msra.mxu0 0.0
  %249 = vmatprep.subr.mxu0 0.0
  %250 = vmatpush1.msra.mxu0 0.0
  %251 = vmatprep.subr.mxu0 0.0
  %252 = vmatpush1.msra.mxu0 0.0
  %253 = vmatprep.subr.mxu0 0.0
  %254 = vmatpush1.msra.mxu0 0.0
  %255 = vmatprep.subr.mxu0 0.0
  %256 = vmatpush1.msra.mxu0 0.0
  %257 = vmatprep.subr.mxu0 0.0
  %258 = vmatpush1.msra.mxu0 0.0
  %259 = vmatprep.subr.mxu0 0.0
  %260 = vmatpush1.msra.mxu0 0.0
  %261 = vmatprep.subr.mxu0 0.0
  %262 = vmatpush1.msra.mxu0 0.0
  %263 = vmatprep.subr.mxu0 0.0
  %264 = vmatpush1.msra.mxu0 0.0
  %265 = vmatprep.subr.mxu0 0.0
  %266 = vmatpush1.msra.mxu0 0.0
  %267 = vmatprep.subr.mxu0 0.0
  %268 = vmatpush1.msra.mxu0 0.0
  %269 = vmatprep.subr.mxu0 0.0
  %270 = vmatpush1.msra.mxu0 0.0
  %271 = vmatprep.subr.mxu0 0.0
  %272 = vmatpush1.msra.mxu0 0.0
  %273 = vmatprep.subr.mxu0 0.0
  %274 = vmatpush1.msra.mxu0 0.0
  %275 = vmatprep.subr.mxu0 0.0
  %276 = vmatpush1.msra.mxu0 0.0
  %277 = vmatprep.subr.mxu0 0.0
  %278 = vmatpush1.msra.mxu0 0.0
  %279 = vmatprep.subr.mxu0 0.0
  %280 = vmatpush1.msra.mxu0 0.0
  %281 = vmatprep.subr.mxu0 0.0
  %282 = vmatpush1.msra.mxu0 0.0
  %283 = vmatprep.subr.mxu0 0.0
  %284 = vmatpush1.msra.mxu0 0.0
  %285 = vmatprep.subr.mxu0 0.0
  %286 = vmatpush1.msra.mxu0 0.0
  %287 = vmatprep.subr.mxu0 0.0
  %288 = vmatpush1.msra.mxu0 0.0
  %289 = vmatprep.subr.mxu0 0.0
  %290 = vmatpush1.msra.mxu0 0.0
  %291 = vmatprep.subr.mxu0 0.0
  %292 = vmatpush1.msra.mxu0 0.0
  %293 = vmatprep.subr.mxu0 0.0
  %294 = vmatpush1.msra.mxu0 0.0
  %295 = vmatprep.subr.mxu0 0.0
  %296 = vmatpush1.msra.mxu0 0.0
  %297 = vmatprep.mubr.f32.mxu0 0.0
  %298 = vmatmul.mubr.f32.gmra.mrb[0].mxu0 %v231
  %v299 = vpop.f32.mrb[0].mxu0
  %v300 = vadd.f32 %v228, %v299
  %v301 = vpop.f32.mrb[0].mxu0
  %302 = vdwg.mxu0
  %303 = vst [vmem:[%s6] sm:$0xff] %v300
  // Predicated region
  $region26: #{_forward.1} parent=0 // pred_check
    _
  $region27: #{_forward.1} parent=0 // pred_check_branch
    %305 = sbr.rel (0) target = $region29
  $region28: #{_forward.1} parent=0 // pred_region
    _
  $region29: #{_forward.1} parent=0 // pred_fallthru
    _
  // Predicated region
  $region30: #{_forward.1} parent=0 // pred_check
    _
  $region31: #{_forward.1} parent=0 // pred_check_branch
    %307 = sbr.rel (0) target = $region33
  $region32: #{_forward.1} parent=0 // pred_region
    _
  $region33: #{_forward.1} parent=0 // pred_fallthru
    _

</llo_original>
